<compile_context>
chip_gen: v5e
topology: v5e:2x2
jax: 0.10.0
libtpu: 0.0.40
codegen_flags: <defaults>
</compile_context>

<pallas_src>
import math

import numpy as np
import jax
import jax.numpy as jnp
from jax.experimental import pallas as pl
from jax.experimental.pallas import tpu as pltpu

NUM_SCALE = 1024.0
GRID_OFFSET = 7.5      # HI4B1C grid: grid[i] = (i - 8) + 0.5 = i - 7.5, i in [0, 16)
FP16_MAX = 65504.0

_HAS_BUFFERED = hasattr(pl, "Buffered")


def _hadamard(k: int) -> np.ndarray:
    """Normalized Walsh-Hadamard matrix H_k / sqrt(k) (k must be a power of 2)."""
    H = np.array([[1.0]], dtype=np.float64)
    while H.shape[0] < k:
        H = np.block([[H, H], [H, -H]])
    assert H.shape[0] == k, "Hadamard size must be a power of two"
    return (H / np.sqrt(k)).astype(np.float32)


def _round_f32_to_fp16(x):
    """RNE-round f32 values to fp16 precision, keeping them stored as f32.

    uint32 bit trick (no f16 dtype inside Mosaic).  Values beyond the fp16 max
    overflow to +/-inf like torch's .half(); fp16-subnormal values keep 10-bit
    relative precision instead of being flushed (difference <= one fp16
    subnormal ulp, irrelevant at these magnitudes).
    """
    bits = pltpu.bitcast(x, jnp.uint32)
    lsb = (bits >> 13) & jnp.uint32(1)                         # round-to-nearest-even
    rounded = (bits + lsb + jnp.uint32(0x00000FFF)) & jnp.uint32(0xFFFFE000)
    r = pltpu.bitcast(rounded, jnp.float32)
    r = jnp.where(r > FP16_MAX, jnp.float32(jnp.inf), r)
    r = jnp.where(r < -FP16_MAX, jnp.float32(-jnp.inf), r)
    return r


# ----------------------------- fused kernel ------------------------------

def _make_fused_kernel(tk: int, inv_in: float, out_scale: float):
    """Build the fused kernel. Grid = (batch_tiles, n_pad // tk)."""
    sub = tk // 8          # packed rows per k-tile (8 codes per int32)

    def kernel(x_ref, hn_ref, qp_ref, hm_ref, o_ref, acc_scr, rsum_scr, qk_scr):
        k = pl.program_id(1)

        @pl.when(k == 0)
        def _():
            acc_scr[...] = jnp.zeros_like(acc_scr)
            rsum_scr[...] = jnp.zeros_like(rsum_scr)

        # ---- stage A (every k step, k-tiled input Hadamard; SU folded into hn):
        #      y[:, kT:(k+1)T] = fp16( (x*SU) @ had_left / 1024 )[:, kT:(k+1)T]
        ycol = jnp.dot(x_ref[...], hn_ref[...], preferred_element_type=jnp.float32)
        yk = _round_f32_to_fp16(ycol * inv_in).astype(jnp.bfloat16)        # (tb, tk)

        # ---- stage B: unpack this n-tile of 4-bit codes and accumulate y @ Q^T.
        # Affine codebook: W = Q - 7.5; the -7.5 part uses the incrementally
        # accumulated rowsum of the SAME bf16 operand the MXU sees.
        packed = qp_ref[...]                                               # (tk//8, m) int32
        for p in range(8):
            nib = (packed >> (4 * p)) & 0xF
            # s32 -> f32 -> bf16: both converts are natively supported and the
            # code values 0..15 are exact in bf16.
            qk_scr[p * sub:(p + 1) * sub, :] = (
                nib.astype(jnp.float32).astype(jnp.bfloat16))
        acc_scr[...] += jnp.dot(yk, qk_scr[...], preferred_element_type=jnp.float32)
        rsum_scr[...] += jnp.sum(yk.astype(jnp.float32), axis=-1, keepdims=True)

        # ---- stage C (last k step): affine fix, fp16 round, output Hadamard
        #      (SV folded into hm), *1024/sqrt(m) folded into out_scale.
        @pl.when(k == pl.num_programs(1) - 1)
        def _():
            z = acc_scr[...] - GRID_OFFSET * rsum_scr[...]
            z16 = _round_f32_to_fp16(z).astype(jnp.bfloat16)
            o = jnp.dot(z16, hm_ref[...], preferred_element_type=jnp.float32)
            o_ref[...] = o * out_scale

    return kernel


# --------------------------- weight preprocessing --------------------------

def _pack_codes(Qidxs, n, m, n_pad, tk):
    """Pre-transpose codes to (n, m) and pack 8 x 4-bit codes per int32.

    Bits [4p, 4p+4) of packed row j of k-tile k hold the code for input
    feature  k*tk + p*(tk//8) + j,  so the kernel unpacks into a (tk, m) bf16
    tile with static sublane-slab stores only (no cross-lane shuffles).
    """
    sub = tk // 8
    qt = np.asarray(Qidxs).astype(np.uint32).T                    # (n, m), values 0..15
    if n_pad != n:
        # Padded y columns are exactly zero, so padded code values are inert.
        qt = np.pad(qt, ((0, n_pad - n), (0, 0)))
    qt = qt.reshape(n_pad // tk, 8, sub, m)
    packed = np.zeros((n_pad // tk, sub, m), dtype=np.uint32)
    for p in range(8):
        packed |= qt[:, p] << np.uint32(4 * p)
    packed = np.ascontiguousarray(packed.reshape(n_pad // 8, m)).view(np.int32)
    return jnp.asarray(packed)


# ------------------------------- wrapper ---------------------------------

def quantized_hi4b1c_linear(x_in, Qidxs, SU, SV, had_left, had_right):
    n = SU.shape[0]
    m = SV.shape[0]
    assert Qidxs.shape == (m, n)

    # ---- one-time weight preprocessing (cached with the checkpoint in practice)
    tk = 128                                   # n-tile for streamed code / had_left blocks
    n_pad = -(-n // tk) * tk                   # pad n so the k pipeline gets aligned tiles
    nk = n_pad // tk

    su = jnp.asarray(SU, jnp.float32)
    sv = jnp.asarray(SV, jnp.float32)
    # Fold SU into had_left and SV into had_right, factoring out the 1/sqrt(dim)
    # normalisations so both matrices are exactly +/-1 in bf16 (SU/SV are signs).
    hn = (su[:, None] * jnp.asarray(had_left, jnp.float32) * math.sqrt(n)
          ).astype(jnp.bfloat16)                                     # (n, n)
    if n_pad != n:
        hn = jnp.pad(hn, ((0, 0), (0, n_pad - n)))                   # (n, n_pad)
    hm = (jnp.asarray(had_right, jnp.float32) * math.sqrt(m) * sv[None, :]
          ).astype(jnp.bfloat16)                                     # (m, m)

    qp = _pack_codes(Qidxs, n, m, n_pad, tk)                         # (n_pad//8, m) int32

    # ---- activations: bf16 is what the MXU consumes anyway (halves x DMA/VMEM).
    x = x_in.reshape(-1, n).astype(jnp.bfloat16)
    B = x.shape[0]
    # Single batch tile for B <= 128 so the weight stream is read exactly once.
    tb = (-(-B // 8) * 8) if B <= 128 else 128
    # TODO(synk): raise tb/tk to 256 for large B on v6e/v7x (2x 256x256 MXU).
    B_pad = -(-B // tb) * tb
    if B_pad != B:
        x = jnp.pad(x, ((0, B_pad - B), (0, 0)))

    inv_in = 1.0 / (math.sqrt(n) * NUM_SCALE)    # had_left's 1/sqrt(n) and the /1024
    out_scale = NUM_SCALE / math.sqrt(m)         # the *1024 and had_right's 1/sqrt(m)

    kernel = _make_fused_kernel(tk, inv_in, out_scale)

    # Scoped-VMEM budget from the actual resident tiles (+pipeline buffers),
    # 2x headroom, never below 32 MiB and capped well under physical VMEM.
    est = (2 * tb * n * 2            # x blocks (bf16, double buffered)
           + 2 * n * tk * 2          # had_left column blocks
           + 3 * (tk // 8) * m * 4   # packed code stream (triple buffered)
           + 2 * m * m * 2           # had_right (worst case: double buffered)
           + 2 * tb * m * 4          # output blocks
           + tb * m * 4 + tb * 128 * 4 + tk * m * 2)   # scratches
    vmem_limit = int(min(110 * 2 ** 20, max(32 * 2 ** 20, 2 * est)))

    def run(use_buffered):
        def spec(shape, imap, nbuf=None):
            if nbuf is not None and use_buffered:
                return pl.BlockSpec(shape, imap, pipeline_mode=pl.Buffered(nbuf))
            return pl.BlockSpec(shape, imap)

        grid_spec = pltpu.PrefetchScalarGridSpec(
            num_scalar_prefetch=0,
            grid=(B_pad // tb, nk),
            in_specs=[
                spec((tb, n), lambda bi, k: (bi, 0)),          # x rows (bf16), resident over k
                spec((n, tk), lambda bi, k: (0, k)),           # had_left cols (SU folded), streamed
                spec((tk // 8, m), lambda bi, k: (k, 0), 3),   # packed 4-bit codes, streamed
                spec((m, m), lambda bi, k: (0, 0), 1),         # had_right (SV folded), constant
            ],
            out_specs=pl.BlockSpec((tb, m), lambda bi, k: (bi, 0)),
            scratch_shapes=[
                pltpu.VMEM((tb, m), jnp.float32),      # quant-matmul accumulator
                pltpu.VMEM((tb, 1), jnp.float32),      # rowsum(y) for the -7.5 affine term
                pltpu.VMEM((tk, m), jnp.bfloat16),     # unpacked code tile
            ],
        )
        return pl.pallas_call(
            kernel,
            out_shape=jax.ShapeDtypeStruct((B_pad, m), jnp.float32),
            grid_spec=grid_spec,
            compiler_params=pltpu.CompilerParams(
                dimension_semantics=("parallel", "arbitrary"),
                vmem_limit_bytes=vmem_limit),
        )(x, hn, qp, hm)

    if _HAS_BUFFERED:
        try:
            out = run(True)
        except Exception:
            # pipeline_mode / Buffered not supported by this JAX build: same
            # kernel with default double-buffering everywhere.
            out = run(False)
    else:
        out = run(False)

    out = out[:B]
    return out.reshape(*x_in.shape[:-1], m)


# --------------------------- pure-JAX reference ---------------------------

def _reference(x_in, Qidxs, SU, SV, had_left, had_right):
    """Faithful emulation of the torch forward (f32 matmuls, fp16 roundings)."""
    n = SU.shape[0]
    m = SV.shape[0]
    x = x_in.reshape(-1, n).astype(jnp.float32)
    x = x * SU.astype(jnp.float32)
    x = x @ had_left.astype(jnp.float32)
    x = (x / NUM_SCALE).astype(jnp.float16)
    grid = (jnp.arange(-8, 8, dtype=jnp.float32) + 0.5).astype(jnp.float16)
    W = grid[Qidxs]                                              # (m, n) fp16
    z = (x.astype(jnp.float32) @ W.astype(jnp.float32).T).astype(jnp.float16)
    x = z.astype(jnp.float32) * NUM_SCALE
    x = x @ had_right.astype(jnp.float32)
    x = x * SV.astype(jnp.float32)
    return x.reshape(*x_in.shape[:-1], m)


if __name__ == "__main__":
    key = jax.random.PRNGKey(0)
    k1, k2, k3, k4 = jax.random.split(key, 4)

    # Small but lane/sublane-friendly shapes (last dims multiples of 128,
    # rows a multiple of 8) so output stores are unmasked vst's.
    n, m = 256, 128                       # in_features, out_features
    x_in = jax.random.normal(k1, (2, 8, n), dtype=jnp.float32)         # 16 rows
    Qidxs = jax.random.randint(k2, (m, n), 0, 16, dtype=jnp.int32)
    SU = jnp.where(jax.random.normal(k3, (n,)) >= 0, 1.0, -1.0).astype(jnp.float16)
    SV = jnp.where(jax.random.normal(k4, (m,)) >= 0, 1.0, -1.0).astype(jnp.float16)

    # K_left = K_right = 1 -> had_* are the full normalized Hadamard matrices.
    had_left = jnp.asarray(_hadamard(n))
    had_right = jnp.asarray(_hadamard(m))

    out = quantized_hi4b1c_linear(x_in, Qidxs, SU, SV, had_left, had_right)
    out = jax.block_until_ready(out)

    ref = _reference(x_in, Qidxs, SU, SV, had_left, had_right)
    assert out.shape == (2, 8, m) and out.dtype == jnp.float32

    rel_err = float(jnp.linalg.norm(out - ref) / jnp.linalg.norm(ref))
    if not rel_err < 2e-2:
        raise AssertionError(
            f"Pallas output mismatches JAX reference (rel L2 err = {rel_err:.3e})")

    print("KERNEL_OK")
</pallas_src>

<mosaic_0001>
module attributes {stable_mosaic.version = 11 : i64} {
  func.func @kernel(%arg0: i32, %arg1: i32, %arg2: memref<16x256xbf16, #tpu.memory_space<vmem>>, %arg3: memref<256x128xbf16, #tpu.memory_space<vmem>>, %arg4: memref<16x128xi32, #tpu.memory_space<vmem>>, %arg5: memref<128x128xbf16, #tpu.memory_space<vmem>>, %arg6: memref<16x128xf32, #tpu.memory_space<vmem>>, %arg7: memref<16x128xf32, #tpu.memory_space<vmem>>, %arg8: memref<16x1xf32, #tpu.memory_space<vmem>>, %arg9: memref<128x128xbf16, #tpu.memory_space<vmem>>) attributes {dimension_semantics = [#tpu.dimension_semantics<parallel>, #tpu.dimension_semantics<arbitrary>], iteration_bounds = array<i64: 1, 2>, scalar_prefetch = 0 : i64, scratch_operands = 3 : i64, tpu.core_type = #tpu.core_type<tc>, window_params = [{transform_indices = @transform_0, window_bounds = array<i64: 16, 256>}, {transform_indices = @transform_1, window_bounds = array<i64: 256, 128>}, {transform_indices = @transform_2, window_bounds = array<i64: 16, 128>}, {pipeline_mode = #tpu.pipeline_mode<synchronous>, transform_indices = @transform_3, window_bounds = array<i64: 128, 128>}, {transform_indices = @transform_4, window_bounds = array<i64: 16, 128>}]} {
    %c0_i32 = arith.constant 0 : i32
    %0 = arith.cmpi eq, %arg1, %c0_i32 : i32
    %1 = arith.extui %0 : i1 to i32
    %c0_i32_0 = arith.constant 0 : i32
    %2 = arith.cmpi ne, %1, %c0_i32_0 : i32
    scf.if %2 {
      %cst_42 = arith.constant 0.000000e+00 : f32
      %99 = vector.broadcast %cst_42 : f32 to vector<16x128xf32>
      %c0_43 = arith.constant 0 : index
      %c0_44 = arith.constant 0 : index
      %100 = vector.load %arg7[%c0_43, %c0_44] : memref<16x128xf32, #tpu.memory_space<vmem>>, vector<16x128xf32>
      tpu.vector_store %arg7[%c0_43, %c0_44], %99 {strides = array<i32>} : memref<16x128xf32, #tpu.memory_space<vmem>>, vector<16x128xf32>,
      %cst_45 = arith.constant 0.000000e+00 : f32
      %101 = vector.broadcast %cst_45 : f32 to vector<16x1xf32>
      %c0_46 = arith.constant 0 : index
      %c0_47 = arith.constant 0 : index
      %102 = vector.load %arg8[%c0_46, %c0_47] : memref<16x1xf32, #tpu.memory_space<vmem>>, vector<16x1xf32>
      tpu.vector_store %arg8[%c0_46, %c0_47], %101 {strides = array<i32>} : memref<16x1xf32, #tpu.memory_space<vmem>>, vector<16x1xf32>,
    } else {
    }
    %c0 = arith.constant 0 : index
    %c0_1 = arith.constant 0 : index
    %3 = vector.load %arg2[%c0, %c0_1] : memref<16x256xbf16, #tpu.memory_space<vmem>>, vector<16x256xbf16>
    %c0_2 = arith.constant 0 : index
    %c0_3 = arith.constant 0 : index
    %4 = vector.load %arg3[%c0_2, %c0_3] : memref<256x128xbf16, #tpu.memory_space<vmem>>, vector<256x128xbf16>
    %cst = arith.constant dense<0.000000e+00> : vector<16x128xf32>
    %5 = tpu.matmul %3, %4, %cst {dimension_numbers = #tpu.dot_dimension_numbers<[1], [0], [0], [1], [0, 0, 1, 1], [], []>} : vector<16x256xbf16>, vector<256x128xbf16>, vector<16x128xf32> -> vector<16x128xf32>
    %cst_4 = arith.constant 6.10351563E-5 : f32
    %6 = vector.broadcast %cst_4 : f32 to vector<16x128xf32>
    %7 = arith.mulf %5, %6 : vector<16x128xf32>
    %8 = tpu.bitcast %7 : vector<16x128xf32> -> vector<16x128xi32>
    %c13_i32 = arith.constant 13 : i32
    %9 = vector.broadcast %c13_i32 : i32 to vector<16x128xi32>
    %10 = arith.shrui %8, %9 : vector<16x128xi32>
    %c1_i32 = arith.constant 1 : i32
    %11 = vector.broadcast %c1_i32 : i32 to vector<16x128xi32>
    %12 = arith.andi %10, %11 : vector<16x128xi32>
    %13 = arith.addi %8, %12 : vector<16x128xi32>
    %c4095_i32 = arith.constant 4095 : i32
    %14 = vector.broadcast %c4095_i32 : i32 to vector<16x128xi32>
    %15 = arith.addi %13, %14 : vector<16x128xi32>
    %c-8192_i32 = arith.constant -8192 : i32
    %16 = vector.broadcast %c-8192_i32 : i32 to vector<16x128xi32>
    %17 = arith.andi %15, %16 : vector<16x128xi32>
    %18 = tpu.bitcast %17 : vector<16x128xi32> -> vector<16x128xf32>
    %cst_5 = arith.constant 6.550400e+04 : f32
    %19 = vector.broadcast %cst_5 : f32 to vector<16x128xf32>
    %20 = arith.cmpf ogt, %18, %19 : vector<16x128xf32>
    %cst_6 = arith.constant 0x7F800000 : f32
    %21 = vector.broadcast %cst_6 : f32 to vector<16x128xf32>
    %22 = arith.select %20, %21, %18 : vector<16x128xi1>, vector<16x128xf32>
    %cst_7 = arith.constant -6.550400e+04 : f32
    %23 = vector.broadcast %cst_7 : f32 to vector<16x128xf32>
    %24 = arith.cmpf olt, %22, %23 : vector<16x128xf32>
    %cst_8 = arith.constant 0xFF800000 : f32
    %25 = vector.broadcast %cst_8 : f32 to vector<16x128xf32>
    %26 = arith.select %24, %25, %22 : vector<16x128xi1>, vector<16x128xf32>
    %27 = arith.truncf %26 : vector<16x128xf32> to vector<16x128xbf16>
    %c0_9 = arith.constant 0 : index
    %c0_10 = arith.constant 0 : index
    %28 = vector.load %arg4[%c0_9, %c0_10] : memref<16x128xi32, #tpu.memory_space<vmem>>, vector<16x128xi32>
    %c0_i32_11 = arith.constant 0 : i32
    %29 = vector.broadcast %c0_i32_11 : i32 to vector<16x128xi32>
    %30 = arith.shrsi %28, %29 : vector<16x128xi32>
    %c15_i32 = arith.constant 15 : i32
    %31 = vector.broadcast %c15_i32 : i32 to vector<16x128xi32>
    %32 = arith.andi %30, %31 : vector<16x128xi32>
    %33 = arith.sitofp %32 : vector<16x128xi32> to vector<16x128xf32>
    %34 = arith.truncf %33 : vector<16x128xf32> to vector<16x128xbf16>
    %c0_12 = arith.constant 0 : index
    %c0_13 = arith.constant 0 : index
    %35 = vector.load %arg9[%c0_12, %c0_13] : memref<128x128xbf16, #tpu.memory_space<vmem>>, vector<16x128xbf16>
    tpu.vector_store %arg9[%c0_12, %c0_13], %34 {strides = array<i32>} : memref<128x128xbf16, #tpu.memory_space<vmem>>, vector<16x128xbf16>,
    %c4_i32 = arith.constant 4 : i32
    %36 = vector.broadcast %c4_i32 : i32 to vector<16x128xi32>
    %37 = arith.shrsi %28, %36 : vector<16x128xi32>
    %c15_i32_14 = arith.constant 15 : i32
    %38 = vector.broadcast %c15_i32_14 : i32 to vector<16x128xi32>
    %39 = arith.andi %37, %38 : vector<16x128xi32>
    %40 = arith.sitofp %39 : vector<16x128xi32> to vector<16x128xf32>
    %41 = arith.truncf %40 : vector<16x128xf32> to vector<16x128xbf16>
    %c16 = arith.constant 16 : index
    %c0_15 = arith.constant 0 : index
    %42 = vector.load %arg9[%c16, %c0_15] : memref<128x128xbf16, #tpu.memory_space<vmem>>, vector<16x128xbf16>
    tpu.vector_store %arg9[%c16, %c0_15], %41 {strides = array<i32>} : memref<128x128xbf16, #tpu.memory_space<vmem>>, vector<16x128xbf16>,
    %c8_i32 = arith.constant 8 : i32
    %43 = vector.broadcast %c8_i32 : i32 to vector<16x128xi32>
    %44 = arith.shrsi %28, %43 : vector<16x128xi32>
    %c15_i32_16 = arith.constant 15 : i32
    %45 = vector.broadcast %c15_i32_16 : i32 to vector<16x128xi32>
    %46 = arith.andi %44, %45 : vector<16x128xi32>
    %47 = arith.sitofp %46 : vector<16x128xi32> to vector<16x128xf32>
    %48 = arith.truncf %47 : vector<16x128xf32> to vector<16x128xbf16>
    %c32 = arith.constant 32 : index
    %c0_17 = arith.constant 0 : index
    %49 = vector.load %arg9[%c32, %c0_17] : memref<128x128xbf16, #tpu.memory_space<vmem>>, vector<16x128xbf16>
    tpu.vector_store %arg9[%c32, %c0_17], %48 {strides = array<i32>} : memref<128x128xbf16, #tpu.memory_space<vmem>>, vector<16x128xbf16>,
    %c12_i32 = arith.constant 12 : i32
    %50 = vector.broadcast %c12_i32 : i32 to vector<16x128xi32>
    %51 = arith.shrsi %28, %50 : vector<16x128xi32>
    %c15_i32_18 = arith.constant 15 : i32
    %52 = vector.broadcast %c15_i32_18 : i32 to vector<16x128xi32>
    %53 = arith.andi %51, %52 : vector<16x128xi32>
    %54 = arith.sitofp %53 : vector<16x128xi32> to vector<16x128xf32>
    %55 = arith.truncf %54 : vector<16x128xf32> to vector<16x128xbf16>
    %c48 = arith.constant 48 : index
    %c0_19 = arith.constant 0 : index
    %56 = vector.load %arg9[%c48, %c0_19] : memref<128x128xbf16, #tpu.memory_space<vmem>>, vector<16x128xbf16>
    tpu.vector_store %arg9[%c48, %c0_19], %55 {strides = array<i32>} : memref<128x128xbf16, #tpu.memory_space<vmem>>, vector<16x128xbf16>,
    %c16_i32 = arith.constant 16 : i32
    %57 = vector.broadcast %c16_i32 : i32 to vector<16x128xi32>
    %58 = arith.shrsi %28, %57 : vector<16x128xi32>
    %c15_i32_20 = arith.constant 15 : i32
    %59 = vector.broadcast %c15_i32_20 : i32 to vector<16x128xi32>
    %60 = arith.andi %58, %59 : vector<16x128xi32>
    %61 = arith.sitofp %60 : vector<16x128xi32> to vector<16x128xf32>
    %62 = arith.truncf %61 : vector<16x128xf32> to vector<16x128xbf16>
    %c64 = arith.constant 64 : index
    %c0_21 = arith.constant 0 : index
    %63 = vector.load %arg9[%c64, %c0_21] : memref<128x128xbf16, #tpu.memory_space<vmem>>, vector<16x128xbf16>
    tpu.vector_store %arg9[%c64, %c0_21], %62 {strides = array<i32>} : memref<128x128xbf16, #tpu.memory_space<vmem>>, vector<16x128xbf16>,
    %c20_i32 = arith.constant 20 : i32
    %64 = vector.broadcast %c20_i32 : i32 to vector<16x128xi32>
    %65 = arith.shrsi %28, %64 : vector<16x128xi32>
    %c15_i32_22 = arith.constant 15 : i32
    %66 = vector.broadcast %c15_i32_22 : i32 to vector<16x128xi32>
    %67 = arith.andi %65, %66 : vector<16x128xi32>
    %68 = arith.sitofp %67 : vector<16x128xi32> to vector<16x128xf32>
    %69 = arith.truncf %68 : vector<16x128xf32> to vector<16x128xbf16>
    %c80 = arith.constant 80 : index
    %c0_23 = arith.constant 0 : index
    %70 = vector.load %arg9[%c80, %c0_23] : memref<128x128xbf16, #tpu.memory_space<vmem>>, vector<16x128xbf16>
    tpu.vector_store %arg9[%c80, %c0_23], %69 {strides = array<i32>} : memref<128x128xbf16, #tpu.memory_space<vmem>>, vector<16x128xbf16>,
    %c24_i32 = arith.constant 24 : i32
    %71 = vector.broadcast %c24_i32 : i32 to vector<16x128xi32>
    %72 = arith.shrsi %28, %71 : vector<16x128xi32>
    %c15_i32_24 = arith.constant 15 : i32
    %73 = vector.broadcast %c15_i32_24 : i32 to vector<16x128xi32>
    %74 = arith.andi %72, %73 : vector<16x128xi32>
    %75 = arith.sitofp %74 : vector<16x128xi32> to vector<16x128xf32>
    %76 = arith.truncf %75 : vector<16x128xf32> to vector<16x128xbf16>
    %c96 = arith.constant 96 : index
    %c0_25 = arith.constant 0 : index
    %77 = vector.load %arg9[%c96, %c0_25] : memref<128x128xbf16, #tpu.memory_space<vmem>>, vector<16x128xbf16>
    tpu.vector_store %arg9[%c96, %c0_25], %76 {strides = array<i32>} : memref<128x128xbf16, #tpu.memory_space<vmem>>, vector<16x128xbf16>,
    %c28_i32 = arith.constant 28 : i32
    %78 = vector.broadcast %c28_i32 : i32 to vector<16x128xi32>
    %79 = arith.shrsi %28, %78 : vector<16x128xi32>
    %c15_i32_26 = arith.constant 15 : i32
    %80 = vector.broadcast %c15_i32_26 : i32 to vector<16x128xi32>
    %81 = arith.andi %79, %80 : vector<16x128xi32>
    %82 = arith.sitofp %81 : vector<16x128xi32> to vector<16x128xf32>
    %83 = arith.truncf %82 : vector<16x128xf32> to vector<16x128xbf16>
    %c112 = arith.constant 112 : index
    %c0_27 = arith.constant 0 : index
    %84 = vector.load %arg9[%c112, %c0_27] : memref<128x128xbf16, #tpu.memory_space<vmem>>, vector<16x128xbf16>
    tpu.vector_store %arg9[%c112, %c0_27], %83 {strides = array<i32>} : memref<128x128xbf16, #tpu.memory_space<vmem>>, vector<16x128xbf16>,
    %c0_28 = arith.constant 0 : index
    %c0_29 = arith.constant 0 : index
    %85 = vector.load %arg7[%c0_28, %c0_29] : memref<16x128xf32, #tpu.memory_space<vmem>>, vector<16x128xf32>
    %c0_30 = arith.constant 0 : index
    %c0_31 = arith.constant 0 : index
    %86 = vector.load %arg9[%c0_30, %c0_31] : memref<128x128xbf16, #tpu.memory_space<vmem>>, vector<128x128xbf16>
    %cst_32 = arith.constant dense<0.000000e+00> : vector<16x128xf32>
    %87 = tpu.matmul %27, %86, %cst_32 {dimension_numbers = #tpu.dot_dimension_numbers<[1], [0], [0], [1], [0, 0, 1, 1], [], []>} : vector<16x128xbf16>, vector<128x128xbf16>, vector<16x128xf32> -> vector<16x128xf32>
    %88 = arith.addf %85, %87 : vector<16x128xf32>
    %c0_33 = arith.constant 0 : index
    %c0_34 = arith.constant 0 : index
    %89 = vector.load %arg7[%c0_33, %c0_34] : memref<16x128xf32, #tpu.memory_space<vmem>>, vector<16x128xf32>
    tpu.vector_store %arg7[%c0_33, %c0_34], %88 {strides = array<i32>} : memref<16x128xf32, #tpu.memory_space<vmem>>, vector<16x128xf32>,
    %c0_35 = arith.constant 0 : index
    %c0_36 = arith.constant 0 : index
    %90 = vector.load %arg8[%c0_35, %c0_36] : memref<16x1xf32, #tpu.memory_space<vmem>>, vector<16x1xf32>
    %91 = arith.extf %27 : vector<16x128xbf16> to vector<16x128xf32>
    %cst_37 = arith.constant dense<0.000000e+00> : vector<16xf32>
    %92 = vector.multi_reduction <add>, %91, %cst_37 [1] : vector<16x128xf32> to vector<16xf32>
    %93 = vector.shape_cast %92 : vector<16xf32> to vector<16x1xf32>
    %94 = arith.addf %90, %93 : vector<16x1xf32>
    %c0_38 = arith.constant 0 : index
    %c0_39 = arith.constant 0 : index
    %95 = vector.load %arg8[%c0_38, %c0_39] : memref<16x1xf32, #tpu.memory_space<vmem>>, vector<16x1xf32>
    tpu.vector_store %arg8[%c0_38, %c0_39], %94 {strides = array<i32>} : memref<16x1xf32, #tpu.memory_space<vmem>>, vector<16x1xf32>,
    %c1_i32_40 = arith.constant 1 : i32
    %96 = arith.cmpi eq, %arg1, %c1_i32_40 : i32
    %97 = arith.extui %96 : i1 to i32
    %c0_i32_41 = arith.constant 0 : i32
    %98 = arith.cmpi ne, %97, %c0_i32_41 : i32
    scf.if %98 {
      %c0_42 = arith.constant 0 : index
      %c0_43 = arith.constant 0 : index
      %99 = vector.load %arg7[%c0_42, %c0_43] : memref<16x128xf32, #tpu.memory_space<vmem>>, vector<16x128xf32>
      %c0_44 = arith.constant 0 : index
      %c0_45 = arith.constant 0 : index
      %100 = vector.load %arg8[%c0_44, %c0_45] : memref<16x1xf32, #tpu.memory_space<vmem>>, vector<16x1xf32>
      %cst_46 = arith.constant 7.500000e+00 : f32
      %101 = vector.broadcast %cst_46 : f32 to vector<16x1xf32>
      %102 = arith.mulf %101, %100 : vector<16x1xf32>
      %103 = vector.broadcast %102 : vector<16x1xf32> to vector<16x128xf32>
      %104 = arith.subf %99, %103 : vector<16x128xf32>
      %105 = tpu.bitcast %104 : vector<16x128xf32> -> vector<16x128xi32>
      %c13_i32_47 = arith.constant 13 : i32
      %106 = vector.broadcast %c13_i32_47 : i32 to vector<16x128xi32>
      %107 = arith.shrui %105, %106 : vector<16x128xi32>
      %c1_i32_48 = arith.constant 1 : i32
      %108 = vector.broadcast %c1_i32_48 : i32 to vector<16x128xi32>
      %109 = arith.andi %107, %108 : vector<16x128xi32>
      %110 = arith.addi %105, %109 : vector<16x128xi32>
      %c4095_i32_49 = arith.constant 4095 : i32
      %111 = vector.broadcast %c4095_i32_49 : i32 to vector<16x128xi32>
      %112 = arith.addi %110, %111 : vector<16x128xi32>
      %c-8192_i32_50 = arith.constant -8192 : i32
      %113 = vector.broadcast %c-8192_i32_50 : i32 to vector<16x128xi32>
      %114 = arith.andi %112, %113 : vector<16x128xi32>
      %115 = tpu.bitcast %114 : vector<16x128xi32> -> vector<16x128xf32>
      %cst_51 = arith.constant 6.550400e+04 : f32
      %116 = vector.broadcast %cst_51 : f32 to vector<16x128xf32>
      %117 = arith.cmpf ogt, %115, %116 : vector<16x128xf32>
      %cst_52 = arith.constant 0x7F800000 : f32
      %118 = vector.broadcast %cst_52 : f32 to vector<16x128xf32>
      %119 = arith.select %117, %118, %115 : vector<16x128xi1>, vector<16x128xf32>
      %cst_53 = arith.constant -6.550400e+04 : f32
      %120 = vector.broadcast %cst_53 : f32 to vector<16x128xf32>
      %121 = arith.cmpf olt, %119, %120 : vector<16x128xf32>
      %cst_54 = arith.constant 0xFF800000 : f32
      %122 = vector.broadcast %cst_54 : f32 to vector<16x128xf32>
      %123 = arith.select %121, %122, %119 : vector<16x128xi1>, vector<16x128xf32>
      %124 = arith.truncf %123 : vector<16x128xf32> to vector<16x128xbf16>
      %c0_55 = arith.constant 0 : index
      %c0_56 = arith.constant 0 : index
      %125 = vector.load %arg5[%c0_55, %c0_56] : memref<128x128xbf16, #tpu.memory_space<vmem>>, vector<128x128xbf16>
      %cst_57 = arith.constant dense<0.000000e+00> : vector<16x128xf32>
      %126 = tpu.matmul %124, %125, %cst_57 {dimension_numbers = #tpu.dot_dimension_numbers<[1], [0], [0], [1], [0, 0, 1, 1], [], []>} : vector<16x128xbf16>, vector<128x128xbf16>, vector<16x128xf32> -> vector<16x128xf32>
      %cst_58 = arith.constant 90.5096664 : f32
      %127 = vector.broadcast %cst_58 : f32 to vector<16x128xf32>
      %128 = arith.mulf %126, %127 : vector<16x128xf32>
      %c0_59 = arith.constant 0 : index
      %c0_60 = arith.constant 0 : index
      %129 = vector.load %arg6[%c0_59, %c0_60] : memref<16x128xf32, #tpu.memory_space<vmem>>, vector<16x128xf32>
      tpu.vector_store %arg6[%c0_59, %c0_60], %128 {strides = array<i32>} : memref<16x128xf32, #tpu.memory_space<vmem>>, vector<16x128xf32>,
    } else {
    }
    return
  }
  func.func @transform_0(%arg0: i32, %arg1: i32) -> (i32, i32) {
    %c0_i32 = arith.constant 0 : i32
    %c0_i32_0 = arith.constant 0 : i32
    return %arg0, %c0_i32 : i32, i32
  }
  func.func @transform_1(%arg0: i32, %arg1: i32) -> (i32, i32) {
    %c0_i32 = arith.constant 0 : i32
    %c0_i32_0 = arith.constant 0 : i32
    return %c0_i32, %arg1 : i32, i32
  }
  func.func @transform_2(%arg0: i32, %arg1: i32) -> (i32, i32) {
    %c0_i32 = arith.constant 0 : i32
    %c0_i32_0 = arith.constant 0 : i32
    return %arg1, %c0_i32 : i32, i32
  }
  func.func @transform_3(%arg0: i32, %arg1: i32) -> (i32, i32) {
    %c0_i32 = arith.constant 0 : i32
    %c0_i32_0 = arith.constant 0 : i32
    %c0_i32_1 = arith.constant 0 : i32
    return %c0_i32, %c0_i32_0 : i32, i32
  }
  func.func @transform_4(%arg0: i32, %arg1: i32) -> (i32, i32) {
    %c0_i32 = arith.constant 0 : i32
    %c0_i32_0 = arith.constant 0 : i32
    return %arg0, %c0_i32 : i32, i32
  }
}

</mosaic_0001>

<llo_original>
// kernel: tpu_custom_call.1
$region0: #{tpu_custom_call.1}
  #allocation0 [shape = 'u32[]', space=smem, size = 0x4, offset = 0x4, fixed_abs, tag = 'smem constant byte address 0x4 - core index']
  #allocation1 [shape = 'u32[72,128]{1,0:T(1,128)}', space=vmem, size = 0x9000, scoped, tag = 'internal scratch']
  #allocation2 [shape = 'f32[16,128]{1,0:T(8,128)}', space=vmem, size = 0x2000, scoped, tag = 'scratch operand']
  #allocation3 [shape = 'f32[16,1]{1,0:T(8,128)}', space=vmem, size = 0x2000, scoped, tag = 'scratch operand']
  #allocation4 [shape = 'bf16[128,128]{1,0:T(8,128)(2,1)}', space=vmem, size = 0x8000, scoped, tag = 'scratch operand']
  %s0 = inlined_call_operand.hbm [shape: bf16[16,256], index: 0, kind: input, shape index: {}]
  %s1 = inlined_call_operand.hbm [shape: bf16[256,256], index: 1, kind: input, shape index: {}]
  %s2 = inlined_call_operand.hbm [shape: s32[32,128], index: 2, kind: input, shape index: {}]
  %s3 = inlined_call_operand.hbm [shape: bf16[128,128], index: 3, kind: input, shape index: {}]
  %s4 = inlined_call_operand.hbm [shape: f32[16,128], index: 4, kind: output, shape index: {}]
  %s5 = sld [smem:[#allocation0]]
  $region73: #{tpu_custom_call.1} parent=0
    _
  %s7 = ssub.s32 1, %s5
  %s8 = scalar_select 0, %s7, %s5
  $region1: #{tpu_custom_call.1} parent=0
    #allocation5 [shape = 'u8[8192]{0}', space=vmem, size = 0x2000, scoped, tag = 'input window, operand 0, single buffered']
    #allocation6 [shape = 's32[2]{0}', space=sflag, size = 0x8, scoped, tag = 'scoped memory for tpu_custom_call.1']
    #allocation7 [shape = 's32[2]{0}', space=sflag, size = 0x8, scoped, tag = 'scoped memory for tpu_custom_call.1']
    #allocation8 [shape = 'u8[131072]{0}', space=vmem, size = 0x20000, scoped, tag = 'input window, operand 1']
    #allocation9 [shape = 's32[2]{0}', space=sflag, size = 0x8, scoped, tag = 'scoped memory for tpu_custom_call.1']
    #allocation10 [shape = 'u8[16384]{0}', space=vmem, size = 0x4000, scoped, tag = 'input window, operand 2']
    #allocation11 [shape = 'u8[32768]{0}', space=vmem, size = 0x8000, scoped, tag = 'input window, operand 3, single buffered']
    #allocation12 [shape = 's32[1]{0}', space=sflag, size = 0x4, scoped, tag = 'scoped memory for tpu_custom_call.1']
    #allocation13 [shape = 'u8[8192]{0}', space=vmem, size = 0x2000, scoped, tag = 'output window, operand 0, single buffered']
    %9 = vsyncpa [#allocation6], 0
    %10 = vsyncpa [#allocation9], 0
    %s11 = scalar_lea.sflag [#allocation9], 1
    %12 = vsyncpa %s11, 0
    %13 = vsyncpa [#allocation12], 0
    %14 = vsyncpa [#allocation7], 0
    loop: start=0, step=1, limit=4
    $region2: #{tpu_custom_call.1} parent=1 // loop_pre_header
      _
    $region3: #{tpu_custom_call.1} parent=1 // loop_header
      %s16 = sphi 0, %s20
      %p17 = scmp.ge.s32.totalorder %s16, 4
      %s23 = sphi 0, %s35
      %s24 = sphi 0, %s31
      %s25 = sphi 0, %s23
      %s26 = sphi 0, %s24
      %s27 = sphi 0, %s25
      %s28 = sphi 0, %s26
      %s38 = sphi 0, %s40
      %s41 = sphi 0, %s38
      %s42 = sphi 0, %s41
      %s58 = sphi 0, %s42
      %s64 = sphi 0, %s66
      %s67 = sphi 0, %s64
      %s68 = sphi 0, %s67
      %s84 = sphi 0, %s68
      %s90 = sphi 0, %s92
      %s93 = sphi 0, %s90
      %s94 = sphi 0, %s93
      %s110 = sphi 0, %s94
      %s114 = sphi 0, %s114
      %s116 = sphi 0, %s114
      %s117 = sphi 0, %s116
      %s131 = sphi 0, %s117
      %s137 = sphi 0, %s139
      %s140 = sphi 0, %s137
      %s141 = sphi 0, %s140
      %s157 = sphi 0, %s141
    $region4: #{tpu_custom_call.1} parent=1 // loop_header_branch
      %19 = sbr.rel (%p17) target = $region8
    $region5: #{tpu_custom_call.1} parent=1 // loop_body
      %s21 = ssub.s32 %s16, 1
      %s22 = ssub.s32 %s16, 2
      %s29 = sadd.s32 1, %s24
      %p30 = scmp.ge.s32.totalorder %s29, 2
      %s31 = scalar_select %p30, 0, %s29
      %s32 = sadd.s32 1, %s23
      %s33 = scalar_select %p30, %s32, %s23
      %p34 = scmp.ge.s32.totalorder %s33, 1
      %s35 = scalar_select %p34, 0, %s33
      %s36 = ssub.s32 %s23, %s35
      %p37 = scmp.eq.s32.totalorder %s36, 0
      %s39 = sadd.s32 %s38, 1
      %s40 = scalar_select %p37, %s38, %s39
      %p43 = pneg %p37
      %p44 = scmp.eq.s32.totalorder %s16, 1
      %p45 = por %p43, %p44
      %p46 = scmp.ne.s32.totalorder %s38, %s41
      %p47 = scmp.eq.s32.totalorder %s16, 0
      %p48 = por %p46, %p47
      %p49 = scmp.ne.s32.totalorder %s38, %s41
      %p50 = scmp.eq.s32.totalorder %s21, 1
      %p51 = por %p49, %p50
      %p52 = scmp.ne.s32.totalorder %s41, %s42
      %p53 = scmp.eq.s32.totalorder %s21, 0
      %p54 = por %p52, %p53
      %p55 = scmp.ne.s32.totalorder %s41, %s42
      %p56 = scmp.eq.s32.totalorder %s22, 1
      %p57 = por %p55, %p56
      %p59 = scmp.ne.s32.totalorder %s42, %s58
      %p60 = scmp.eq.s32.totalorder %s22, 0
      %p61 = por %p59, %p60
      %s62 = ssub.s32 %s24, %s31
      %p63 = scmp.eq.s32.totalorder %s62, 0
      %s65 = sadd.s32 %s64, 1
      %s66 = scalar_select %p63, %s64, %s65
      %p69 = pneg %p63
      %p70 = scmp.eq.s32.totalorder %s16, 1
      %p71 = por %p69, %p70
      %p72 = scmp.ne.s32.totalorder %s64, %s67
      %p73 = scmp.eq.s32.totalorder %s16, 0
      %p74 = por %p72, %p73
      %p75 = scmp.ne.s32.totalorder %s64, %s67
      %p76 = scmp.eq.s32.totalorder %s21, 1
      %p77 = por %p75, %p76
      %p78 = scmp.ne.s32.totalorder %s67, %s68
      %p79 = scmp.eq.s32.totalorder %s21, 0
      %p80 = por %p78, %p79
      %p81 = scmp.ne.s32.totalorder %s67, %s68
      %p82 = scmp.eq.s32.totalorder %s22, 1
      %p83 = por %p81, %p82
      %p85 = scmp.ne.s32.totalorder %s68, %s84
      %p86 = scmp.eq.s32.totalorder %s22, 0
      %p87 = por %p85, %p86
      %s88 = ssub.s32 %s24, %s31
      %p89 = scmp.eq.s32.totalorder %s88, 0
      %s91 = sadd.s32 %s90, 1
      %s92 = scalar_select %p89, %s90, %s91
      %p95 = pneg %p89
      %p96 = scmp.eq.s32.totalorder %s16, 1
      %p97 = por %p95, %p96
      %p98 = scmp.ne.s32.totalorder %s90, %s93
      %p99 = scmp.eq.s32.totalorder %s16, 0
      %p100 = por %p98, %p99
      %p101 = scmp.ne.s32.totalorder %s90, %s93
      %p102 = scmp.eq.s32.totalorder %s21, 1
      %p103 = por %p101, %p102
      %p104 = scmp.ne.s32.totalorder %s93, %s94
      %p105 = scmp.eq.s32.totalorder %s21, 0
      %p106 = por %p104, %p105
      %p107 = scmp.ne.s32.totalorder %s93, %s94
      %p108 = scmp.eq.s32.totalorder %s22, 1
      %p109 = por %p107, %p108
      %p111 = scmp.ne.s32.totalorder %s94, %s110
      %p112 = scmp.eq.s32.totalorder %s22, 0
      %p113 = por %p111, %p112
      %s115 = sadd.s32 %s114, 1
      %p118 = scmp.eq.s32.totalorder %s16, 1
      %p119 = scmp.ne.s32.totalorder %s114, %s116
      %p120 = scmp.eq.s32.totalorder %s16, 0
      %p121 = por %p119, %p120
      %p122 = scmp.ne.s32.totalorder %s114, %s116
      %p123 = scmp.eq.s32.totalorder %s21, 1
      %p124 = por %p122, %p123
      %p125 = scmp.ne.s32.totalorder %s116, %s117
      %p126 = scmp.eq.s32.totalorder %s21, 0
      %p127 = por %p125, %p126
      %p128 = scmp.ne.s32.totalorder %s116, %s117
      %p129 = scmp.eq.s32.totalorder %s22, 1
      %p130 = por %p128, %p129
      %p132 = scmp.ne.s32.totalorder %s117, %s131
      %p133 = scmp.eq.s32.totalorder %s22, 0
      %p134 = por %p132, %p133
      %s135 = ssub.s32 %s23, %s35
      %p136 = scmp.eq.s32.totalorder %s135, 0
      %s138 = sadd.s32 %s137, 1
      %s139 = scalar_select %p136, %s137, %s138
      %p142 = pneg %p136
      %p143 = scmp.eq.s32.totalorder %s16, 1
      %p144 = por %p142, %p143
      %p145 = scmp.ne.s32.totalorder %s137, %s140
      %p146 = scmp.eq.s32.totalorder %s16, 0
      %p147 = por %p145, %p146
      %p148 = scmp.ne.s32.totalorder %s137, %s140
      %p149 = scmp.eq.s32.totalorder %s21, 1
      %p150 = por %p148, %p149
      %p151 = scmp.ne.s32.totalorder %s140, %s141
      %p152 = scmp.eq.s32.totalorder %s21, 0
      %p153 = por %p151, %p152
      %p154 = scmp.ne.s32.totalorder %s140, %s141
      %p155 = scmp.eq.s32.totalorder %s22, 1
      %p156 = por %p154, %p155
      %p158 = scmp.ne.s32.totalorder %s141, %s157
      %p159 = scmp.eq.s32.totalorder %s22, 0
      %p160 = por %p158, %p159
      %p161 = scmp.le.s32.totalorder 1, %s16
      %p162 = scmp.lt.s32.totalorder %s16, 3
      %p163 = pnand %p161, %p162
      %p164 = pneg %p163
      // Predicated region
      $region9: #{tpu_custom_call.1} parent=5 // pred_check
        _
      $region10: #{tpu_custom_call.1} parent=5 // pred_check_branch
        %166 = sbr.rel (%p163) target = $region12
      $region11: #{tpu_custom_call.1} parent=5 // pred_region
        %s167 = ssub.s32 %s16, 1
        // Predicated region
        $region13: #{tpu_custom_call.1} parent=11 // pred_check
          %p168 = pneg %p54
        $region14: #{tpu_custom_call.1} parent=11 // pred_check_branch
          %170 = sbr.rel (%p168) target = $region16
        $region15: #{tpu_custom_call.1} parent=11 // pred_region
          %s171 = smul.u32 2, %s25
          %173 = vsyncadd [#allocation6], 0
          %s174 = smul.addr %s171, 2
          %s175 = smul.addr %s174, 4
          %s176 = scalar_lea.hbm %s0, %s175
          %s177 = sshll.u32 %s176, 4
          %s178 = int_to_ptr.hbm [resolvable:$true] %s177
          %s179 = sshll.u32 [#allocation5], 4
          %s180 = int_to_ptr.vmem [resolvable:$true] %s179
          %185 = dma.hbm_to_vmem [thread:$0]  %s178, 256, %s180, [#allocation6], 128, 128, 8
        $region16: #{tpu_custom_call.1} parent=11 // pred_fallthru
          _
        // Predicated region
        $region17: #{tpu_custom_call.1} parent=11 // pred_check
          %p186 = pneg %p127
        $region18: #{tpu_custom_call.1} parent=11 // pred_check_branch
          %188 = sbr.rel (%p186) target = $region20
        $region19: #{tpu_custom_call.1} parent=11 // pred_region
          %190 = vsyncadd [#allocation12], 0
          %s191 = sshll.u32 %s3, 4
          %s192 = int_to_ptr.hbm [resolvable:$true] %s191
          %s193 = sshll.u32 [#allocation11], 4
          %s194 = int_to_ptr.vmem [resolvable:$true] %s193
          %199 = dma.hbm_to_vmem [thread:$0]  %s192, 1024, %s194, [#allocation12], 64, 64, 4
        $region20: #{tpu_custom_call.1} parent=11 // pred_fallthru
          _
      $region12: #{tpu_custom_call.1} parent=5 // pred_fallthru
        _
      %p200 = scmp.lt.s32.totalorder %s16, 2
      // Predicated region
      $region21: #{tpu_custom_call.1} parent=5 // pred_check
        %p201 = pneg %p200
      $region22: #{tpu_custom_call.1} parent=5 // pred_check_branch
        %203 = sbr.rel (%p201) target = $region24
      $region23: #{tpu_custom_call.1} parent=5 // pred_region
        // Predicated region
        $region25: #{tpu_custom_call.1} parent=23 // pred_check
          %p204 = pneg %p74
        $region26: #{tpu_custom_call.1} parent=23 // pred_check_branch
          %206 = sbr.rel (%p204) target = $region28
        $region27: #{tpu_custom_call.1} parent=23 // pred_region
          %s207 = sand.u32 %s16, 1
          %s208 = scalar_lea.sflag [#allocation9], %s207
          %s209 = sand.u32 %s64, 1
          %s210 = smul.addr %s209, 128
          %s211 = scalar_lea.vmem [#allocation8], %s210
          %213 = vsyncadd %s208, 0
          %s214 = smul.addr %s24, 4
          %s215 = scalar_lea.hbm %s1, %s214
          %s216 = sshll.u32 %s215, 4
          %s217 = int_to_ptr.hbm [resolvable:$true] %s216
          %s218 = sshll.u32 %s211, 4
          %s219 = int_to_ptr.vmem [resolvable:$true] %s218
          %224 = dma.hbm_to_vmem [thread:$0]  %s217, 2048, %s219, %s208, 128, 64, 4
        $region28: #{tpu_custom_call.1} parent=23 // pred_fallthru
          _
        // Predicated region
        $region29: #{tpu_custom_call.1} parent=23 // pred_check
          %p225 = pneg %p100
        $region30: #{tpu_custom_call.1} parent=23 // pred_check_branch
          %227 = sbr.rel (%p225) target = $region32
        $region31: #{tpu_custom_call.1} parent=23 // pred_region
          %s228 = sand.u32 %s16, 1
          %s229 = scalar_lea.sflag [#allocation9], %s228
          %s230 = sand.u32 %s90, 1
          %s231 = smul.addr %s230, 16
          %s232 = scalar_lea.vmem [#allocation10], %s231
          %s233 = smul.u32 2, %s24
          %235 = vsyncadd %s229, 0
          %s236 = smul.addr %s233, 8
          %s237 = scalar_lea.hbm %s2, %s236
          %s238 = sshll.u32 %s237, 4
          %s239 = int_to_ptr.hbm [resolvable:$true] %s238
          %s240 = sshll.u32 %s232, 4
          %s241 = int_to_ptr.vmem [resolvable:$true] %s240
          %246 = dma.hbm_to_vmem [thread:$0]  %s239, 256, %s241, %s229, 128, 128, 8
        $region32: #{tpu_custom_call.1} parent=23 // pred_fallthru
          _
      $region24: #{tpu_custom_call.1} parent=5 // pred_fallthru
        _
      %p247 = scmp.le.s32.totalorder 1, %s16
      %p248 = scmp.lt.s32.totalorder %s16, 3
      %p249 = pnand %p247, %p248
      %p250 = pneg %p249
      // Predicated region
      $region33: #{tpu_custom_call.1} parent=5 // pred_check
        _
      $region34: #{tpu_custom_call.1} parent=5 // pred_check_branch
        %252 = sbr.rel (%p249) target = $region36
      $region35: #{tpu_custom_call.1} parent=5 // pred_region
        %s253 = ssub.s32 %s16, 1
        // Predicated region
        $region37: #{tpu_custom_call.1} parent=35 // pred_check
          %p254 = pneg %p54
        $region38: #{tpu_custom_call.1} parent=35 // pred_check_branch
          %256 = sbr.rel (%p254) target = $region40
        $region39: #{tpu_custom_call.1} parent=35 // pred_region
          %258 = dma.done [#allocation6], 256
        $region40: #{tpu_custom_call.1} parent=35 // pred_fallthru
          _
        %s259 = sand.u32 %s21, 1
        %s260 = scalar_lea.sflag [#allocation9], %s259
        %s261 = sand.u32 %s67, 1
        %s262 = smul.addr %s261, 128
        %s263 = scalar_lea.vmem [#allocation8], %s262
        // Predicated region
        $region41: #{tpu_custom_call.1} parent=35 // pred_check
          %p264 = pneg %p80
        $region42: #{tpu_custom_call.1} parent=35 // pred_check_branch
          %266 = sbr.rel (%p264) target = $region44
        $region43: #{tpu_custom_call.1} parent=35 // pred_region
          %268 = dma.done %s260, 2048
        $region44: #{tpu_custom_call.1} parent=35 // pred_fallthru
          _
        %s269 = sand.u32 %s21, 1
        %s270 = scalar_lea.sflag [#allocation9], %s269
        %s271 = sand.u32 %s93, 1
        %s272 = smul.addr %s271, 16
        %s273 = scalar_lea.vmem [#allocation10], %s272
        // Predicated region
        $region45: #{tpu_custom_call.1} parent=35 // pred_check
          %p274 = pneg %p106
        $region46: #{tpu_custom_call.1} parent=35 // pred_check_branch
          %276 = sbr.rel (%p274) target = $region48
        $region47: #{tpu_custom_call.1} parent=35 // pred_region
          %278 = dma.done %s270, 256
        $region48: #{tpu_custom_call.1} parent=35 // pred_fallthru
          _
        // Predicated region
        $region49: #{tpu_custom_call.1} parent=35 // pred_check
          %p279 = pneg %p127
        $region50: #{tpu_custom_call.1} parent=35 // pred_check_branch
          %281 = sbr.rel (%p279) target = $region52
        $region51: #{tpu_custom_call.1} parent=35 // pred_region
          %283 = dma.done [#allocation12], 1024
        $region52: #{tpu_custom_call.1} parent=35 // pred_fallthru
          _
        %p284 = pneg %p54
        %p285 = pneg %p51
        %s286 = sand.u32 %s21, 1
        %s287 = scalar_lea.sflag [#allocation9], %s286
        %s288 = sand.u32 %s67, 1
        %s289 = smul.addr %s288, 128
        %s290 = scalar_lea.vmem [#allocation8], %s289
        %p291 = pneg %p80
        %p292 = pneg %p77
        %s293 = sand.u32 %s21, 1
        %s294 = scalar_lea.sflag [#allocation9], %s293
        %s295 = sand.u32 %s93, 1
        %s296 = smul.addr %s295, 16
        %s297 = scalar_lea.vmem [#allocation10], %s296
        %p298 = pneg %p106
        %p299 = pneg %p103
        %p300 = pneg %p127
        %p301 = pneg %p124
        %p302 = pneg %p153
        %p303 = pneg %p150
        %s304 = smul.u32 2, %s25
        %s305 = smul.u32 2, %s26
        %s306 = smul.u32 2, %s25
        %p307 = scmp.eq.s32.totalorder %s26, 0
        // Predicated region
        $region53: #{tpu_custom_call.1} parent=35 // pred_check
          %p308 = pneg %p307
        $region54: #{tpu_custom_call.1} parent=35 // pred_check_branch
          %310 = sbr.rel (%p308) target = $region56
        $region55: #{tpu_custom_call.1} parent=35 // pred_region
          %311 = vst [vmem:[#allocation2] sm:$0xff] 0.0
          %312 = vst [vmem:[#allocation2 + $0x8] sm:$0xff] 0.0
          %vm313 = vcmask 7168
          %314 = vst.msk [vmem:[#allocation3] sm:$0xff] %vm313, 0.0
          %315 = vst.msk [vmem:[#allocation3 + $0x8] sm:$0xff] %vm313, 0.0
        $region56: #{tpu_custom_call.1} parent=35 // pred_fallthru
          _
        %v316 = vld [vmem:[#allocation5] sm:$0xff]
        %v317 = vld [vmem:[#allocation5 + $0x8] sm:$0xff]
        %v318 = vld [vmem:[%s263] sm:$0xf]
        %v319 = vld [vmem:[%s263 + $0x4] sm:$0xf]
        %v320 = vld [vmem:[%s263 + $0x8] sm:$0xf]
        %v321 = vld [vmem:[%s263 + $0xc] sm:$0xf]
        %v322 = vld [vmem:[%s263 + $0x10] sm:$0xf]
        %v323 = vld [vmem:[%s263 + $0x14] sm:$0xf]
        %v324 = vld [vmem:[%s263 + $0x18] sm:$0xf]
        %v325 = vld [vmem:[%s263 + $0x1c] sm:$0xf]
        %v326 = vld [vmem:[%s263 + $0x20] sm:$0xf]
        %v327 = vld [vmem:[%s263 + $0x24] sm:$0xf]
        %v328 = vld [vmem:[%s263 + $0x28] sm:$0xf]
        %v329 = vld [vmem:[%s263 + $0x2c] sm:$0xf]
        %v330 = vld [vmem:[%s263 + $0x30] sm:$0xf]
        %v331 = vld [vmem:[%s263 + $0x34] sm:$0xf]
        %v332 = vld [vmem:[%s263 + $0x38] sm:$0xf]
        %v333 = vld [vmem:[%s263 + $0x3c] sm:$0xf]
        %v334 = vld [vmem:[%s263 + $0x40] sm:$0xf]
        %v335 = vld [vmem:[%s263 + $0x44] sm:$0xf]
        %v336 = vld [vmem:[%s263 + $0x48] sm:$0xf]
        %v337 = vld [vmem:[%s263 + $0x4c] sm:$0xf]
        %v338 = vld [vmem:[%s263 + $0x50] sm:$0xf]
        %v339 = vld [vmem:[%s263 + $0x54] sm:$0xf]
        %v340 = vld [vmem:[%s263 + $0x58] sm:$0xf]
        %v341 = vld [vmem:[%s263 + $0x5c] sm:$0xf]
        %v342 = vld [vmem:[%s263 + $0x60] sm:$0xf]
        %v343 = vld [vmem:[%s263 + $0x64] sm:$0xf]
        %v344 = vld [vmem:[%s263 + $0x68] sm:$0xf]
        %v345 = vld [vmem:[%s263 + $0x6c] sm:$0xf]
        %v346 = vld [vmem:[%s263 + $0x70] sm:$0xf]
        %v347 = vld [vmem:[%s263 + $0x74] sm:$0xf]
        %v348 = vld [vmem:[%s263 + $0x78] sm:$0xf]
        %v349 = vld [vmem:[%s263 + $0x7c] sm:$0xf]
        %v352 = vunpack.c.l.b16 %v316
        %v353 = vunpack.c.h.b16 %v316
        %v354 = vunpack.c.l.b16 %v317
        %v355 = vunpack.c.h.b16 %v317
        %v356 = vpack.c.b16 %v354, %v352
        %v357 = vpack.c.b16 %v355, %v353
        %v392 = vunpack.c.l.b16 %v318
        %v393 = vunpack.c.l.b16 %v319
        %v394 = vunpack.c.l.b16 %v320
        %v395 = vunpack.c.l.b16 %v321
        %v396 = vunpack.c.l.b16 %v322
        %v397 = vunpack.c.l.b16 %v323
        %v398 = vunpack.c.l.b16 %v324
        %v399 = vunpack.c.l.b16 %v325
        %v400 = vunpack.c.l.b16 %v326
        %v401 = vunpack.c.l.b16 %v327
        %v402 = vunpack.c.l.b16 %v328
        %v403 = vunpack.c.l.b16 %v329
        %v404 = vunpack.c.l.b16 %v330
        %v405 = vunpack.c.l.b16 %v331
        %v406 = vunpack.c.l.b16 %v332
        %v407 = vunpack.c.l.b16 %v333
        %v408 = vunpack.c.l.b16 %v334
        %v409 = vunpack.c.l.b16 %v335
        %v410 = vunpack.c.l.b16 %v336
        %v411 = vunpack.c.l.b16 %v337
        %v412 = vunpack.c.l.b16 %v338
        %v413 = vunpack.c.l.b16 %v339
        %v414 = vunpack.c.l.b16 %v340
        %v415 = vunpack.c.l.b16 %v341
        %v416 = vunpack.c.l.b16 %v342
        %v417 = vunpack.c.l.b16 %v343
        %v418 = vunpack.c.l.b16 %v344
        %v419 = vunpack.c.l.b16 %v345
        %v420 = vunpack.c.l.b16 %v346
        %v421 = vunpack.c.l.b16 %v347
        %v422 = vunpack.c.l.b16 %v348
        %v423 = vunpack.c.l.b16 %v349
        %v424 = vpack.c.b16 %v393, %v392
        %v425 = vpack.c.b16 %v395, %v394
        %v426 = vpack.c.b16 %v397, %v396
        %v427 = vpack.c.b16 %v399, %v398
        %v428 = vpack.c.b16 %v401, %v400
        %v429 = vpack.c.b16 %v403, %v402
        %v430 = vpack.c.b16 %v405, %v404
        %v431 = vpack.c.b16 %v407, %v406
        %v432 = vpack.c.b16 %v409, %v408
        %v433 = vpack.c.b16 %v411, %v410
        %v434 = vpack.c.b16 %v413, %v412
        %v435 = vpack.c.b16 %v415, %v414
        %v436 = vpack.c.b16 %v417, %v416
        %v437 = vpack.c.b16 %v419, %v418
        %v438 = vpack.c.b16 %v421, %v420
        %v439 = vpack.c.b16 %v423, %v422
        %456 = vmatpush.bf16.msra.mxu0 %v431
        %457 = vmatpush.bf16.msra.mxu0 %v430
        %458 = vmatpush.bf16.msra.mxu0 %v429
        %459 = vmatpush.bf16.msra.mxu0 %v428
        %460 = vmatpush.bf16.msra.mxu0 %v427
        %461 = vmatpush.bf16.msra.mxu0 %v426
        %462 = vmatpush.bf16.msra.mxu0 %v425
        %463 = vmatpush.bf16.msra.mxu0 %v424
        %464 = vmatmul.bf16.gmra.mxu0 %v356
        %v465 = vpop.f32.mrf.mxu0
        %v466 = vadd.f32 0.0, %v465
        %v467 = vpop.f32.mrf.mxu0
        %v468 = vadd.f32 0.0, %v467
        %469 = vdwg.mxu0
        %470 = vmatpush.bf16.msra.mxu0 %v439
        %471 = vmatpush.bf16.msra.mxu0 %v438
        %472 = vmatpush.bf16.msra.mxu0 %v437
        %473 = vmatpush.bf16.msra.mxu0 %v436
        %474 = vmatpush.bf16.msra.mxu0 %v435
        %475 = vmatpush.bf16.msra.mxu0 %v434
        %476 = vmatpush.bf16.msra.mxu0 %v433
        %477 = vmatpush.bf16.msra.mxu0 %v432
        %478 = vmatmul.bf16.gmra.mxu0 %v357
        %v479 = vpop.f32.mrf.mxu0
        %v480 = vadd.f32 %v466, %v479
        %v481 = vpop.f32.mrf.mxu0
        %v482 = vadd.f32 %v468, %v481
        %483 = vdwg.mxu0
        %v484 = vmul.f32 %v480, 6.1035156e-05
        %v485 = vmul.f32 %v482, 6.1035156e-05
        %v488 = vshrl.u32 %v484, 13
        %v489 = vshrl.u32 %v485, 13
        %v490 = vand.u32 %v488, 1
        %v491 = vand.u32 %v489, 1
        %v492 = vadd.s32 %v484, %v490
        %v493 = vadd.s32 %v485, %v491
        %v494 = vadd.s32 %v492, 4095
        %v495 = vadd.s32 %v493, 4095
        %v496 = vand.u32 %v494, 4294959104
        %v497 = vand.u32 %v495, 4294959104
        %vm500 = vcmp.gt.f32.partialorder %v496, 65504.0
        %vm501 = vcmp.gt.f32.partialorder %v497, 65504.0
        %v502 = vsel %vm500, inf, %v496
        %v503 = vsel %vm501, inf, %v497
        %vm504 = vcmp.lt.f32.partialorder %v502, -65504.0
        %vm505 = vcmp.lt.f32.partialorder %v503, -65504.0
        %v506 = vsel %vm504, -inf, %v502
        %v507 = vsel %vm505, -inf, %v503
        %v508 = vpack.c.bf16 %v507, %v506
        %v509 = vld [vmem:[%s273] sm:$0xff]
        %v510 = vld [vmem:[%s273 + $0x8] sm:$0xff]
        %v511 = vand.u32 %v509, 15
        %v512 = vand.u32 %v510, 15
        %v513 = vcvt.s32.f32 %v511
        %v514 = vcvt.s32.f32 %v512
        %v515 = vpack.c.bf16 %v513, %v513
        %v516 = vpack.c.bf16 %v514, %v514
        %517 = vst [vmem:[#allocation4] sm:$0xf] %v515
        %518 = vst [vmem:[#allocation4 + $0x4] sm:$0xf] %v516
        %v519 = vshra.s32 %v509, 4
        %v520 = vshra.s32 %v510, 4
        %v521 = vand.u32 %v519, 15
        %v522 = vand.u32 %v520, 15
        %v523 = vcvt.s32.f32 %v521
        %v524 = vcvt.s32.f32 %v522
        %v525 = vpack.c.bf16 %v523, %v523
        %v526 = vpack.c.bf16 %v524, %v524
        %527 = vst [vmem:[#allocation4 + $0x8] sm:$0xf] %v525
        %528 = vst [vmem:[#allocation4 + $0xc] sm:$0xf] %v526
        %v529 = vshra.s32 %v509, 8
        %v530 = vshra.s32 %v510, 8
        %v531 = vand.u32 %v529, 15
        %v532 = vand.u32 %v530, 15
        %v533 = vcvt.s32.f32 %v531
        %v534 = vcvt.s32.f32 %v532
        %v535 = vpack.c.bf16 %v533, %v533
        %v536 = vpack.c.bf16 %v534, %v534
        %537 = vst [vmem:[#allocation4 + $0x10] sm:$0xf] %v535
        %538 = vst [vmem:[#allocation4 + $0x14] sm:$0xf] %v536
        %v539 = vshra.s32 %v509, 12
        %v540 = vshra.s32 %v510, 12
        %v541 = vand.u32 %v539, 15
        %v542 = vand.u32 %v540, 15
        %v543 = vcvt.s32.f32 %v541
        %v544 = vcvt.s32.f32 %v542
        %v545 = vpack.c.bf16 %v543, %v543
        %v546 = vpack.c.bf16 %v544, %v544
        %547 = vst [vmem:[#allocation4 + $0x18] sm:$0xf] %v545
        %548 = vst [vmem:[#allocation4 + $0x1c] sm:$0xf] %v546
        %v549 = vshra.s32 %v509, 16
        %v550 = vshra.s32 %v510, 16
        %v551 = vand.u32 %v549, 15
        %v552 = vand.u32 %v550, 15
        %v553 = vcvt.s32.f32 %v551
        %v554 = vcvt.s32.f32 %v552
        %v555 = vpack.c.bf16 %v553, %v553
        %v556 = vpack.c.bf16 %v554, %v554
        %557 = vst [vmem:[#allocation4 + $0x20] sm:$0xf] %v555
        %558 = vst [vmem:[#allocation4 + $0x24] sm:$0xf] %v556
        %v559 = vshra.s32 %v509, 20
        %v560 = vshra.s32 %v510, 20
        %v561 = vand.u32 %v559, 15
        %v562 = vand.u32 %v560, 15
        %v563 = vcvt.s32.f32 %v561
        %v564 = vcvt.s32.f32 %v562
        %v565 = vpack.c.bf16 %v563, %v563
        %v566 = vpack.c.bf16 %v564, %v564
        %567 = vst [vmem:[#allocation4 + $0x28] sm:$0xf] %v565
        %568 = vst [vmem:[#allocation4 + $0x2c] sm:$0xf] %v566
        %v569 = vshra.s32 %v509, 24
        %v570 = vshra.s32 %v510, 24
        %v571 = vand.u32 %v569, 15
        %v572 = vand.u32 %v570, 15
        %v573 = vcvt.s32.f32 %v571
        %v574 = vcvt.s32.f32 %v572
        %v575 = vpack.c.bf16 %v573, %v573
        %v576 = vpack.c.bf16 %v574, %v574
        %577 = vst [vmem:[#allocation4 + $0x30] sm:$0xf] %v575
        %578 = vst [vmem:[#allocation4 + $0x34] sm:$0xf] %v576
        %v579 = vshra.s32 %v509, 28
        %v580 = vshra.s32 %v510, 28
        %v581 = vand.u32 %v579, 15
        %v582 = vand.u32 %v580, 15
        %v583 = vcvt.s32.f32 %v581
        %v584 = vcvt.s32.f32 %v582
        %v585 = vpack.c.bf16 %v583, %v583
        %v586 = vpack.c.bf16 %v584, %v584
        %587 = vst [vmem:[#allocation4 + $0x38] sm:$0xf] %v585
        %588 = vst [vmem:[#allocation4 + $0x3c] sm:$0xf] %v586
        %v589 = vld [vmem:[#allocation2] sm:$0xff]
        %v590 = vld [vmem:[#allocation2 + $0x8] sm:$0xff]
        %v591 = vld [vmem:[#allocation4] sm:$0xf]
        %v592 = vld [vmem:[#allocation4 + $0x4] sm:$0xf]
        %v593 = vld [vmem:[#allocation4 + $0x8] sm:$0xf]
        %v594 = vld [vmem:[#allocation4 + $0xc] sm:$0xf]
        %v595 = vld [vmem:[#allocation4 + $0x10] sm:$0xf]
        %v596 = vld [vmem:[#allocation4 + $0x14] sm:$0xf]
        %v597 = vld [vmem:[#allocation4 + $0x18] sm:$0xf]
        %v598 = vld [vmem:[#allocation4 + $0x1c] sm:$0xf]
        %v599 = vld [vmem:[#allocation4 + $0x20] sm:$0xf]
        %v600 = vld [vmem:[#allocation4 + $0x24] sm:$0xf]
        %v601 = vld [vmem:[#allocation4 + $0x28] sm:$0xf]
        %v602 = vld [vmem:[#allocation4 + $0x2c] sm:$0xf]
        %v603 = vld [vmem:[#allocation4 + $0x30] sm:$0xf]
        %v604 = vld [vmem:[#allocation4 + $0x34] sm:$0xf]
        %v605 = vld [vmem:[#allocation4 + $0x38] sm:$0xf]
        %v606 = vld [vmem:[#allocation4 + $0x3c] sm:$0xf]
        %v623 = vunpack.c.l.b16 %v591
        %v624 = vunpack.c.l.b16 %v592
        %v625 = vunpack.c.l.b16 %v593
        %v626 = vunpack.c.l.b16 %v594
        %v627 = vunpack.c.l.b16 %v595
        %v628 = vunpack.c.l.b16 %v596
        %v629 = vunpack.c.l.b16 %v597
        %v630 = vunpack.c.l.b16 %v598
        %v631 = vunpack.c.l.b16 %v599
        %v632 = vunpack.c.l.b16 %v600
        %v633 = vunpack.c.l.b16 %v601
        %v634 = vunpack.c.l.b16 %v602
        %v635 = vunpack.c.l.b16 %v603
        %v636 = vunpack.c.l.b16 %v604
        %v637 = vunpack.c.l.b16 %v605
        %v638 = vunpack.c.l.b16 %v606
        %v639 = vpack.c.b16 %v624, %v623
        %v640 = vpack.c.b16 %v626, %v625
        %v641 = vpack.c.b16 %v628, %v627
        %v642 = vpack.c.b16 %v630, %v629
        %v643 = vpack.c.b16 %v632, %v631
        %v644 = vpack.c.b16 %v634, %v633
        %v645 = vpack.c.b16 %v636, %v635
        %v646 = vpack.c.b16 %v638, %v637
        %655 = vmatpush.bf16.msra.mxu0 %v646
        %656 = vmatpush.bf16.msra.mxu0 %v645
        %657 = vmatpush.bf16.msra.mxu0 %v644
        %658 = vmatpush.bf16.msra.mxu0 %v643
        %659 = vmatpush.bf16.msra.mxu0 %v642
        %660 = vmatpush.bf16.msra.mxu0 %v641
        %661 = vmatpush.bf16.msra.mxu0 %v640
        %662 = vmatpush.bf16.msra.mxu0 %v639
        %663 = vmatmul.bf16.gmra.mxu0 %v508
        %v664 = vpop.f32.mrf.mxu0
        %v665 = vadd.f32 0.0, %v664
        %v666 = vpop.f32.mrf.mxu0
        %v667 = vadd.f32 0.0, %v666
        %668 = vdwg.mxu0
        %v669 = vadd.f32 %v589, %v665
        %v670 = vadd.f32 %v590, %v667
        %671 = vst [vmem:[#allocation2] sm:$0xff] %v669
        %672 = vst [vmem:[#allocation2 + $0x8] sm:$0xff] %v670
        %v673 = vld [vmem:[#allocation3] sm:$0xff]
        %v674 = vld [vmem:[#allocation3 + $0x8] sm:$0xff]
        %v675 = vunpack.c.l.bf16 %v508
        %v676 = vunpack.c.h.bf16 %v508
        %677 = vadd.xlane.f32.xlu0 %v675
        %v678 = vpop.xlane.xlu0 %677
        %679 = vadd.xlane.f32.xlu0 %v676
        %v680 = vpop.xlane.xlu0 %679
        %v681 = vadd.f32 %v673, %v678
        %v682 = vadd.f32 %v674, %v680
        %vm683 = vcmask 7168
        %684 = vst.msk [vmem:[#allocation3] sm:$0xff] %vm683, %v681
        %685 = vst.msk [vmem:[#allocation3 + $0x8] sm:$0xff] %vm683, %v682
        %p686 = scmp.eq.s32.totalorder %s26, 1
        // Predicated region
        $region57: #{tpu_custom_call.1} parent=35 // pred_check
          %p687 = pneg %p686
        $region58: #{tpu_custom_call.1} parent=35 // pred_check_branch
          %689 = sbr.rel (%p687) target = $region60
        $region59: #{tpu_custom_call.1} parent=35 // pred_region
          %v690 = vld [vmem:[#allocation2] sm:$0xff]
          %v691 = vld [vmem:[#allocation2 + $0x8] sm:$0xff]
          %v692 = vld [vmem:[#allocation3] sm:$0xff]
          %v693 = vld [vmem:[#allocation3 + $0x8] sm:$0xff]
          %v694 = vmul.f32 %v692, 7.5
          %v695 = vmul.f32 %v693, 7.5
          %697 = vset.pattern.permute.xlu0 0
          %698 = vperm.xlu0 %697, %v694
          %v699 = vpop.permute.xlu0 %698
          %702 = vset.pattern.permute.xlu0 0
          %703 = vperm.xlu0 %702, %v695
          %v704 = vpop.permute.xlu0 %703
          %v706 = vsub.f32 %v690, %v699
          %v707 = vsub.f32 %v691, %v704
          %v710 = vshrl.u32 %v706, 13
          %v711 = vshrl.u32 %v707, 13
          %v712 = vand.u32 %v710, 1
          %v713 = vand.u32 %v711, 1
          %v714 = vadd.s32 %v706, %v712
          %v715 = vadd.s32 %v707, %v713
          %v716 = vadd.s32 %v714, 4095
          %v717 = vadd.s32 %v715, 4095
          %v718 = vand.u32 %v716, 4294959104
          %v719 = vand.u32 %v717, 4294959104
          %vm722 = vcmp.gt.f32.partialorder %v718, 65504.0
          %vm723 = vcmp.gt.f32.partialorder %v719, 65504.0
          %v724 = vsel %vm722, inf, %v718
          %v725 = vsel %vm723, inf, %v719
          %vm726 = vcmp.lt.f32.partialorder %v724, -65504.0
          %vm727 = vcmp.lt.f32.partialorder %v725, -65504.0
          %v728 = vsel %vm726, -inf, %v724
          %v729 = vsel %vm727, -inf, %v725
          %v730 = vpack.c.bf16 %v729, %v728
          %v731 = vld [vmem:[#allocation11] sm:$0xf]
          %v732 = vld [vmem:[#allocation11 + $0x4] sm:$0xf]
          %v733 = vld [vmem:[#allocation11 + $0x8] sm:$0xf]
          %v734 = vld [vmem:[#allocation11 + $0xc] sm:$0xf]
          %v735 = vld [vmem:[#allocation11 + $0x10] sm:$0xf]
          %v736 = vld [vmem:[#allocation11 + $0x14] sm:$0xf]
          %v737 = vld [vmem:[#allocation11 + $0x18] sm:$0xf]
          %v738 = vld [vmem:[#allocation11 + $0x1c] sm:$0xf]
          %v739 = vld [vmem:[#allocation11 + $0x20] sm:$0xf]
          %v740 = vld [vmem:[#allocation11 + $0x24] sm:$0xf]
          %v741 = vld [vmem:[#allocation11 + $0x28] sm:$0xf]
          %v742 = vld [vmem:[#allocation11 + $0x2c] sm:$0xf]
          %v743 = vld [vmem:[#allocation11 + $0x30] sm:$0xf]
          %v744 = vld [vmem:[#allocation11 + $0x34] sm:$0xf]
          %v745 = vld [vmem:[#allocation11 + $0x38] sm:$0xf]
          %v746 = vld [vmem:[#allocation11 + $0x3c] sm:$0xf]
          %v763 = vunpack.c.l.b16 %v731
          %v764 = vunpack.c.l.b16 %v732
          %v765 = vunpack.c.l.b16 %v733
          %v766 = vunpack.c.l.b16 %v734
          %v767 = vunpack.c.l.b16 %v735
          %v768 = vunpack.c.l.b16 %v736
          %v769 = vunpack.c.l.b16 %v737
          %v770 = vunpack.c.l.b16 %v738
          %v771 = vunpack.c.l.b16 %v739
          %v772 = vunpack.c.l.b16 %v740
          %v773 = vunpack.c.l.b16 %v741
          %v774 = vunpack.c.l.b16 %v742
          %v775 = vunpack.c.l.b16 %v743
          %v776 = vunpack.c.l.b16 %v744
          %v777 = vunpack.c.l.b16 %v745
          %v778 = vunpack.c.l.b16 %v746
          %v779 = vpack.c.b16 %v764, %v763
          %v780 = vpack.c.b16 %v766, %v765
          %v781 = vpack.c.b16 %v768, %v767
          %v782 = vpack.c.b16 %v770, %v769
          %v783 = vpack.c.b16 %v772, %v771
          %v784 = vpack.c.b16 %v774, %v773
          %v785 = vpack.c.b16 %v776, %v775
          %v786 = vpack.c.b16 %v778, %v777
          %795 = vmatpush.bf16.msra.mxu0 %v786
          %796 = vmatpush.bf16.msra.mxu0 %v785
          %797 = vmatpush.bf16.msra.mxu0 %v784
          %798 = vmatpush.bf16.msra.mxu0 %v783
          %799 = vmatpush.bf16.msra.mxu0 %v782
          %800 = vmatpush.bf16.msra.mxu0 %v781
          %801 = vmatpush.bf16.msra.mxu0 %v780
          %802 = vmatpush.bf16.msra.mxu0 %v779
          %803 = vmatmul.bf16.gmra.mxu0 %v730
          %v804 = vpop.f32.mrf.mxu0
          %v805 = vadd.f32 0.0, %v804
          %v806 = vpop.f32.mrf.mxu0
          %v807 = vadd.f32 0.0, %v806
          %808 = vdwg.mxu0
          %v809 = vmul.f32 %v805, 90.50967
          %v810 = vmul.f32 %v807, 90.50967
          %811 = vst [vmem:[#allocation13] sm:$0xff] %v809
          %812 = vst [vmem:[#allocation13 + $0x8] sm:$0xff] %v810
        $region60: #{tpu_custom_call.1} parent=35 // pred_fallthru
          _
        // Predicated region
        $region61: #{tpu_custom_call.1} parent=35 // pred_check
          %p813 = pneg %p150
        $region62: #{tpu_custom_call.1} parent=35 // pred_check_branch
          %815 = sbr.rel (%p813) target = $region64
        $region63: #{tpu_custom_call.1} parent=35 // pred_region
          %s816 = smul.u32 2, %s25
          %818 = vsyncadd [#allocation7], 0
          %s819 = smul.addr %s816, 8
          %s820 = scalar_lea.hbm %s4, %s819
          %s821 = sshll.u32 [#allocation13], 4
          %s822 = int_to_ptr.vmem [resolvable:$true] %s821
          %s823 = sshll.u32 %s820, 4
          %s824 = int_to_ptr.hbm [resolvable:$true] %s823
          %829 = dma.vmem_to_hbm [thread:$0]  %s822, 256, %s824, [#allocation7], 128, 128, 8
        $region64: #{tpu_custom_call.1} parent=35 // pred_fallthru
          _
        // Predicated region
        $region65: #{tpu_custom_call.1} parent=35 // pred_check
          %p830 = pneg %p150
        $region66: #{tpu_custom_call.1} parent=35 // pred_check_branch
          %832 = sbr.rel (%p830) target = $region68
        $region67: #{tpu_custom_call.1} parent=35 // pred_region
          %834 = dma.done [#allocation7], 256
        $region68: #{tpu_custom_call.1} parent=35 // pred_fallthru
          _
      $region36: #{tpu_custom_call.1} parent=5 // pred_fallthru
        _
      %p835 = scmp.le.s32.totalorder 2, %s16
      // Predicated region
      $region69: #{tpu_custom_call.1} parent=5 // pred_check
        %p836 = pneg %p835
      $region70: #{tpu_custom_call.1} parent=5 // pred_check_branch
        %838 = sbr.rel (%p836) target = $region72
      $region71: #{tpu_custom_call.1} parent=5 // pred_region
        %s839 = ssub.s32 %s16, 2
      $region72: #{tpu_custom_call.1} parent=5 // pred_fallthru
        _
    $region6: #{tpu_custom_call.1} parent=1 // loop_footer
      %s20 = sadd.s32 1, %s16
    $region7: #{tpu_custom_call.1} parent=1 // loop_footer_branch
      %15 = sbr.rel target = $region3
    $region8: #{tpu_custom_call.1} parent=1 // loop_exit
      _
    %840 = vsyncpa [#allocation6], 1
    %s841 = scalar_lea.sflag [#allocation6], 1
    %842 = vsyncpa %s841, 1
    %843 = vsyncpa [#allocation9], 1
    %s844 = scalar_lea.sflag [#allocation9], 1
    %845 = vsyncpa %s844, 1
    %846 = vsyncpa [#allocation12], 1
    %847 = vsyncpa [#allocation7], 1
    %s848 = scalar_lea.sflag [#allocation7], 1
    %849 = vsyncpa %s848, 1

</llo_original>
